<compile_context>
chip_gen: v7x
topology: tpu7x:2x2x1
jax: 0.10.0
libtpu: 0.0.40
codegen_flags: <defaults>
</compile_context>

<pallas_src>
import jax
import jax.numpy as jnp
from jax.experimental import pallas as pl
from jax.experimental.pallas import tpu as pltpu


def lstm_tagger_kernel(x_ref, rec_ref, lin_ref, out_ref):
    T, D = x_ref.shape
    H = rec_ref.shape[1] // 4

    # Static sub-views of the packed parameter slab (loaded into vregs once).
    wih = rec_ref[0:D, :]                    # [D, 4H]  i/f/o cols pre-scaled by 0.5
    whh = rec_ref[D:D + H, :]                # [H, 4H]  i/f/o cols pre-scaled by 0.5
    b = rec_ref[D + H:D + H + 1, :]          # [1, 4H]  (b_ih + b_hh), pre-scaled
    aff_s = rec_ref[D + H + 1:D + H + 2, :]  # [1, 4H]  0.5 on i/f/o lanes, 1.0 on g
    aff_o = rec_ref[D + H + 2:D + H + 3, :]  # [1, 4H]  0.5 on i/f/o lanes, 0.0 on g

    # Input contribution to all gates for every timestep (one MXU call):
    #   xg[t] = x[t] @ (S * W_ih^T) + S * (b_ih + b_hh)        -> [T, 4H]
    xg = jnp.dot(x_ref[...], wih, preferred_element_type=jnp.float32) + b

    # h_0 = 0, c_0 = 0 (PyTorch default when no initial state is given).
    h = jnp.zeros((1, H), jnp.float32)
    c = jnp.zeros((1, H), jnp.float32)

    hs = []
    for t in range(T):  # fully unrolled: T is static and small
        gates = xg[t:t + 1, :] + jnp.dot(
            h, whh, preferred_element_type=jnp.float32
        )  # [1, 4H], already pre-scaled on the sigmoid lanes
        t_all = jnp.tanh(gates)          # single EUP op over the whole gate row
        act = aff_s * t_all + aff_o      # sigmoid on i/f/o lanes, tanh on g lanes
        i = act[:, 0:H]
        f = act[:, H:2 * H]
        g = act[:, 2 * H:3 * H]
        o = act[:, 3 * H:4 * H]
        c = f * c + i * g
        h = o * jnp.tanh(c)
        hs.append(h)

    hs = jnp.concatenate(hs, axis=0)     # [T, H], still in vregs

    # hidden2tag:  tag = hs @ W_out^T + b_out                   -> [T, O]
    wout = lin_ref[0:H, :]               # [H, O]
    bout = lin_ref[H:H + 1, :]           # [1, O]
    tag = jnp.dot(hs, wout, preferred_element_type=jnp.float32) + bout

    # log_softmax over the class (last) dimension.
    m = jnp.max(tag, axis=1, keepdims=True)
    lse = jnp.log(jnp.sum(jnp.exp(tag - m), axis=1, keepdims=True)) + m
    out_ref[...] = tag - lse


def prepare_params(w_ih, w_hh, b_ih, b_hh, w_out, b_out):
    """One-time parameter packing.  Keep OUT of the per-call hot path."""
    H4, _ = w_ih.shape
    H = H4 // 4

    # Per-gate-lane constants (gate order i, f, g, o as in PyTorch nn.LSTM).
    # sigmoid(x) == 0.5*tanh(0.5*x) + 0.5, so pre-scale the sigmoid gates'
    # weights/bias by 0.5 and fix up with an affine after a single tanh.
    def lanes(i_v, f_v, g_v, o_v):
        return jnp.concatenate([
            jnp.full((H,), i_v, jnp.float32),
            jnp.full((H,), f_v, jnp.float32),
            jnp.full((H,), g_v, jnp.float32),
            jnp.full((H,), o_v, jnp.float32),
        ])

    gate_scale = lanes(0.5, 0.5, 1.0, 0.5)   # pre-scale of gate pre-activations
    aff_scale = lanes(0.5, 0.5, 1.0, 0.5)    # post-tanh scale
    aff_off = lanes(0.5, 0.5, 0.0, 0.5)      # post-tanh offset

    wih_t = jnp.transpose(w_ih).astype(jnp.float32) * gate_scale[None, :]   # [D, 4H]
    whh_t = jnp.transpose(w_hh).astype(jnp.float32) * gate_scale[None, :]   # [H, 4H]
    b = ((b_ih + b_hh).astype(jnp.float32) * gate_scale)[None, :]           # [1, 4H]

    rec_slab = jnp.concatenate(
        [wih_t, whh_t, b, aff_scale[None, :], aff_off[None, :]], axis=0
    )                                                                       # [D+H+3, 4H]
    lin_slab = jnp.concatenate(
        [jnp.transpose(w_out).astype(jnp.float32),
         b_out.astype(jnp.float32)[None, :]], axis=0
    )                                                                       # [H+1, O]
    return rec_slab, lin_slab


def lstm_tagger(features, rec_slab, lin_slab):
    """features: [T, D]; slabs from prepare_params().  Returns [T, O] log-softmax."""
    T, _ = features.shape
    O = lin_slab.shape[1]

    full = lambda shape: pl.BlockSpec(shape, lambda i: tuple(0 for _ in shape))

    return pl.pallas_call(
        lstm_tagger_kernel,
        out_shape=jax.ShapeDtypeStruct((T, O), jnp.float32),
        grid_spec=pltpu.PrefetchScalarGridSpec(
            num_scalar_prefetch=0,
            grid=(1,),
            in_specs=[
                full(tuple(features.shape)),
                full(tuple(rec_slab.shape)),
                full(tuple(lin_slab.shape)),
            ],
            out_specs=full((T, O)),
            scratch_shapes=[],  # all state lives in vregs
        ),
        compiler_params=pltpu.CompilerParams(
            dimension_semantics=("arbitrary",)
        ),
    )(features.astype(jnp.float32), rec_slab, lin_slab)


def reference(features, w_ih, w_hh, b_ih, b_hh, w_out, b_out):
    """Pure-JAX reference of the PyTorch forward (for sanity check)."""
    T, _ = features.shape
    H = w_hh.shape[1]
    h = jnp.zeros((H,), jnp.float32)
    c = jnp.zeros((H,), jnp.float32)
    hs = []
    for t in range(T):
        gates = features[t] @ w_ih.T + b_ih + h @ w_hh.T + b_hh
        i = jax.nn.sigmoid(gates[0:H])
        f = jax.nn.sigmoid(gates[H:2 * H])
        g = jnp.tanh(gates[2 * H:3 * H])
        o = jax.nn.sigmoid(gates[3 * H:4 * H])
        c = f * c + i * g
        h = o * jnp.tanh(c)
        hs.append(h)
    hs = jnp.stack(hs)
    tag = hs @ w_out.T + b_out
    return jax.nn.log_softmax(tag, axis=1)


if __name__ == "__main__":
    # Small shapes consistent with the module: seq=8, input_dim=16, hidden=32, output=8.
    T, D, H, O = 8, 16, 32, 8

    key = jax.random.PRNGKey(0)
    ks = jax.random.split(key, 7)
    scale = 1.0 / jnp.sqrt(H)  # PyTorch LSTM/Linear default uniform range
    features = jax.random.normal(ks[0], (T, D), jnp.float32)
    w_ih = jax.random.uniform(ks[1], (4 * H, D), jnp.float32, -scale, scale)
    w_hh = jax.random.uniform(ks[2], (4 * H, H), jnp.float32, -scale, scale)
    b_ih = jax.random.uniform(ks[3], (4 * H,), jnp.float32, -scale, scale)
    b_hh = jax.random.uniform(ks[4], (4 * H,), jnp.float32, -scale, scale)
    w_out = jax.random.uniform(ks[5], (O, H), jnp.float32, -scale, scale)
    b_out = jax.random.uniform(ks[6], (O,), jnp.float32, -scale, scale)

    # One-time parameter packing (hoisted out of the per-call path).
    rec_slab, lin_slab = prepare_params(w_ih, w_hh, b_ih, b_hh, w_out, b_out)
    rec_slab, lin_slab = jax.block_until_ready((rec_slab, lin_slab))

    out = lstm_tagger(features, rec_slab, lin_slab)
    out = jax.block_until_ready(out)

    ref = reference(features, w_ih, w_hh, b_ih, b_hh, w_out, b_out)
    assert out.shape == (T, O)
    assert jnp.allclose(out, ref, atol=1e-5, rtol=1e-5), "mismatch vs reference"

    print("KERNEL_OK")
</pallas_src>

<mosaic_0001>
module attributes {stable_mosaic.version = 11 : i64} {
  func.func @lstm_tagger_kernel(%arg0: i32, %arg1: memref<8x16xf32, #tpu.memory_space<vmem>>, %arg2: memref<51x128xf32, #tpu.memory_space<vmem>>, %arg3: memref<33x8xf32, #tpu.memory_space<vmem>>, %arg4: memref<8x8xf32, #tpu.memory_space<vmem>>) attributes {dimension_semantics = [#tpu.dimension_semantics<arbitrary>], iteration_bounds = array<i64: 1>, scalar_prefetch = 0 : i64, scratch_operands = 0 : i64, tpu.core_type = #tpu.core_type<tc>, window_params = [{pipeline_mode = #tpu.pipeline_mode<synchronous>, transform_indices = @transform_0, window_bounds = array<i64: 8, 16>}, {pipeline_mode = #tpu.pipeline_mode<synchronous>, transform_indices = @transform_1, window_bounds = array<i64: 51, 128>}, {pipeline_mode = #tpu.pipeline_mode<synchronous>, transform_indices = @transform_2, window_bounds = array<i64: 33, 8>}, {pipeline_mode = #tpu.pipeline_mode<synchronous>, transform_indices = @transform_3, window_bounds = array<i64: 8, 8>}]} {
    %c0 = arith.constant 0 : index
    %c0_0 = arith.constant 0 : index
    %0 = vector.load %arg2[%c0, %c0_0] : memref<51x128xf32, #tpu.memory_space<vmem>>, vector<16x128xf32>
    %c16 = arith.constant 16 : index
    %c0_1 = arith.constant 0 : index
    %1 = vector.load %arg2[%c16, %c0_1] : memref<51x128xf32, #tpu.memory_space<vmem>>, vector<32x128xf32>
    %c48 = arith.constant 48 : index
    %c0_2 = arith.constant 0 : index
    %2 = vector.load %arg2[%c48, %c0_2] : memref<51x128xf32, #tpu.memory_space<vmem>>, vector<1x128xf32>
    %c49 = arith.constant 49 : index
    %c0_3 = arith.constant 0 : index
    %3 = vector.load %arg2[%c49, %c0_3] : memref<51x128xf32, #tpu.memory_space<vmem>>, vector<1x128xf32>
    %c50 = arith.constant 50 : index
    %c0_4 = arith.constant 0 : index
    %4 = vector.load %arg2[%c50, %c0_4] : memref<51x128xf32, #tpu.memory_space<vmem>>, vector<1x128xf32>
    %c0_5 = arith.constant 0 : index
    %c0_6 = arith.constant 0 : index
    %5 = vector.load %arg1[%c0_5, %c0_6] : memref<8x16xf32, #tpu.memory_space<vmem>>, vector<8x16xf32>
    %cst = arith.constant dense<0.000000e+00> : vector<8x128xf32>
    %6 = tpu.matmul %5, %0, %cst {dimension_numbers = #tpu.dot_dimension_numbers<[1], [0], [0], [1], [0, 0, 1, 1], [], []>} : vector<8x16xf32>, vector<16x128xf32>, vector<8x128xf32> -> vector<8x128xf32>
    %7 = vector.broadcast %2 : vector<1x128xf32> to vector<8x128xf32>
    %8 = arith.addf %6, %7 : vector<8x128xf32>
    %cst_7 = arith.constant 0.000000e+00 : f32
    %9 = vector.broadcast %cst_7 : f32 to vector<1x32xf32>
    %cst_8 = arith.constant 0.000000e+00 : f32
    %10 = vector.broadcast %cst_8 : f32 to vector<1x32xf32>
    %11 = vector.extract_strided_slice %8 {offsets = [0, 0], sizes = [1, 128], strides = [1, 1]} : vector<8x128xf32> to vector<1x128xf32>
    %cst_9 = arith.constant dense<0.000000e+00> : vector<1x128xf32>
    %12 = tpu.matmul %9, %1, %cst_9 {dimension_numbers = #tpu.dot_dimension_numbers<[1], [0], [0], [1], [0, 0, 1, 1], [], []>} : vector<1x32xf32>, vector<32x128xf32>, vector<1x128xf32> -> vector<1x128xf32>
    %13 = arith.addf %11, %12 : vector<1x128xf32>
    %14 = math.tanh %13 : vector<1x128xf32>
    %15 = arith.mulf %3, %14 : vector<1x128xf32>
    %16 = arith.addf %15, %4 : vector<1x128xf32>
    %17 = vector.extract_strided_slice %16 {offsets = [0, 0], sizes = [1, 32], strides = [1, 1]} : vector<1x128xf32> to vector<1x32xf32>
    %18 = vector.extract_strided_slice %16 {offsets = [0, 32], sizes = [1, 32], strides = [1, 1]} : vector<1x128xf32> to vector<1x32xf32>
    %19 = vector.extract_strided_slice %16 {offsets = [0, 64], sizes = [1, 32], strides = [1, 1]} : vector<1x128xf32> to vector<1x32xf32>
    %20 = vector.extract_strided_slice %16 {offsets = [0, 96], sizes = [1, 32], strides = [1, 1]} : vector<1x128xf32> to vector<1x32xf32>
    %21 = arith.mulf %18, %10 : vector<1x32xf32>
    %22 = arith.mulf %17, %19 : vector<1x32xf32>
    %23 = arith.addf %21, %22 : vector<1x32xf32>
    %24 = math.tanh %23 : vector<1x32xf32>
    %25 = arith.mulf %20, %24 : vector<1x32xf32>
    %26 = vector.extract_strided_slice %8 {offsets = [1, 0], sizes = [1, 128], strides = [1, 1]} : vector<8x128xf32> to vector<1x128xf32>
    %cst_10 = arith.constant dense<0.000000e+00> : vector<1x128xf32>
    %27 = tpu.matmul %25, %1, %cst_10 {dimension_numbers = #tpu.dot_dimension_numbers<[1], [0], [0], [1], [0, 0, 1, 1], [], []>} : vector<1x32xf32>, vector<32x128xf32>, vector<1x128xf32> -> vector<1x128xf32>
    %28 = arith.addf %26, %27 : vector<1x128xf32>
    %29 = math.tanh %28 : vector<1x128xf32>
    %30 = arith.mulf %3, %29 : vector<1x128xf32>
    %31 = arith.addf %30, %4 : vector<1x128xf32>
    %32 = vector.extract_strided_slice %31 {offsets = [0, 0], sizes = [1, 32], strides = [1, 1]} : vector<1x128xf32> to vector<1x32xf32>
    %33 = vector.extract_strided_slice %31 {offsets = [0, 32], sizes = [1, 32], strides = [1, 1]} : vector<1x128xf32> to vector<1x32xf32>
    %34 = vector.extract_strided_slice %31 {offsets = [0, 64], sizes = [1, 32], strides = [1, 1]} : vector<1x128xf32> to vector<1x32xf32>
    %35 = vector.extract_strided_slice %31 {offsets = [0, 96], sizes = [1, 32], strides = [1, 1]} : vector<1x128xf32> to vector<1x32xf32>
    %36 = arith.mulf %33, %23 : vector<1x32xf32>
    %37 = arith.mulf %32, %34 : vector<1x32xf32>
    %38 = arith.addf %36, %37 : vector<1x32xf32>
    %39 = math.tanh %38 : vector<1x32xf32>
    %40 = arith.mulf %35, %39 : vector<1x32xf32>
    %41 = vector.extract_strided_slice %8 {offsets = [2, 0], sizes = [1, 128], strides = [1, 1]} : vector<8x128xf32> to vector<1x128xf32>
    %cst_11 = arith.constant dense<0.000000e+00> : vector<1x128xf32>
    %42 = tpu.matmul %40, %1, %cst_11 {dimension_numbers = #tpu.dot_dimension_numbers<[1], [0], [0], [1], [0, 0, 1, 1], [], []>} : vector<1x32xf32>, vector<32x128xf32>, vector<1x128xf32> -> vector<1x128xf32>
    %43 = arith.addf %41, %42 : vector<1x128xf32>
    %44 = math.tanh %43 : vector<1x128xf32>
    %45 = arith.mulf %3, %44 : vector<1x128xf32>
    %46 = arith.addf %45, %4 : vector<1x128xf32>
    %47 = vector.extract_strided_slice %46 {offsets = [0, 0], sizes = [1, 32], strides = [1, 1]} : vector<1x128xf32> to vector<1x32xf32>
    %48 = vector.extract_strided_slice %46 {offsets = [0, 32], sizes = [1, 32], strides = [1, 1]} : vector<1x128xf32> to vector<1x32xf32>
    %49 = vector.extract_strided_slice %46 {offsets = [0, 64], sizes = [1, 32], strides = [1, 1]} : vector<1x128xf32> to vector<1x32xf32>
    %50 = vector.extract_strided_slice %46 {offsets = [0, 96], sizes = [1, 32], strides = [1, 1]} : vector<1x128xf32> to vector<1x32xf32>
    %51 = arith.mulf %48, %38 : vector<1x32xf32>
    %52 = arith.mulf %47, %49 : vector<1x32xf32>
    %53 = arith.addf %51, %52 : vector<1x32xf32>
    %54 = math.tanh %53 : vector<1x32xf32>
    %55 = arith.mulf %50, %54 : vector<1x32xf32>
    %56 = vector.extract_strided_slice %8 {offsets = [3, 0], sizes = [1, 128], strides = [1, 1]} : vector<8x128xf32> to vector<1x128xf32>
    %cst_12 = arith.constant dense<0.000000e+00> : vector<1x128xf32>
    %57 = tpu.matmul %55, %1, %cst_12 {dimension_numbers = #tpu.dot_dimension_numbers<[1], [0], [0], [1], [0, 0, 1, 1], [], []>} : vector<1x32xf32>, vector<32x128xf32>, vector<1x128xf32> -> vector<1x128xf32>
    %58 = arith.addf %56, %57 : vector<1x128xf32>
    %59 = math.tanh %58 : vector<1x128xf32>
    %60 = arith.mulf %3, %59 : vector<1x128xf32>
    %61 = arith.addf %60, %4 : vector<1x128xf32>
    %62 = vector.extract_strided_slice %61 {offsets = [0, 0], sizes = [1, 32], strides = [1, 1]} : vector<1x128xf32> to vector<1x32xf32>
    %63 = vector.extract_strided_slice %61 {offsets = [0, 32], sizes = [1, 32], strides = [1, 1]} : vector<1x128xf32> to vector<1x32xf32>
    %64 = vector.extract_strided_slice %61 {offsets = [0, 64], sizes = [1, 32], strides = [1, 1]} : vector<1x128xf32> to vector<1x32xf32>
    %65 = vector.extract_strided_slice %61 {offsets = [0, 96], sizes = [1, 32], strides = [1, 1]} : vector<1x128xf32> to vector<1x32xf32>
    %66 = arith.mulf %63, %53 : vector<1x32xf32>
    %67 = arith.mulf %62, %64 : vector<1x32xf32>
    %68 = arith.addf %66, %67 : vector<1x32xf32>
    %69 = math.tanh %68 : vector<1x32xf32>
    %70 = arith.mulf %65, %69 : vector<1x32xf32>
    %71 = vector.extract_strided_slice %8 {offsets = [4, 0], sizes = [1, 128], strides = [1, 1]} : vector<8x128xf32> to vector<1x128xf32>
    %cst_13 = arith.constant dense<0.000000e+00> : vector<1x128xf32>
    %72 = tpu.matmul %70, %1, %cst_13 {dimension_numbers = #tpu.dot_dimension_numbers<[1], [0], [0], [1], [0, 0, 1, 1], [], []>} : vector<1x32xf32>, vector<32x128xf32>, vector<1x128xf32> -> vector<1x128xf32>
    %73 = arith.addf %71, %72 : vector<1x128xf32>
    %74 = math.tanh %73 : vector<1x128xf32>
    %75 = arith.mulf %3, %74 : vector<1x128xf32>
    %76 = arith.addf %75, %4 : vector<1x128xf32>
    %77 = vector.extract_strided_slice %76 {offsets = [0, 0], sizes = [1, 32], strides = [1, 1]} : vector<1x128xf32> to vector<1x32xf32>
    %78 = vector.extract_strided_slice %76 {offsets = [0, 32], sizes = [1, 32], strides = [1, 1]} : vector<1x128xf32> to vector<1x32xf32>
    %79 = vector.extract_strided_slice %76 {offsets = [0, 64], sizes = [1, 32], strides = [1, 1]} : vector<1x128xf32> to vector<1x32xf32>
    %80 = vector.extract_strided_slice %76 {offsets = [0, 96], sizes = [1, 32], strides = [1, 1]} : vector<1x128xf32> to vector<1x32xf32>
    %81 = arith.mulf %78, %68 : vector<1x32xf32>
    %82 = arith.mulf %77, %79 : vector<1x32xf32>
    %83 = arith.addf %81, %82 : vector<1x32xf32>
    %84 = math.tanh %83 : vector<1x32xf32>
    %85 = arith.mulf %80, %84 : vector<1x32xf32>
    %86 = vector.extract_strided_slice %8 {offsets = [5, 0], sizes = [1, 128], strides = [1, 1]} : vector<8x128xf32> to vector<1x128xf32>
    %cst_14 = arith.constant dense<0.000000e+00> : vector<1x128xf32>
    %87 = tpu.matmul %85, %1, %cst_14 {dimension_numbers = #tpu.dot_dimension_numbers<[1], [0], [0], [1], [0, 0, 1, 1], [], []>} : vector<1x32xf32>, vector<32x128xf32>, vector<1x128xf32> -> vector<1x128xf32>
    %88 = arith.addf %86, %87 : vector<1x128xf32>
    %89 = math.tanh %88 : vector<1x128xf32>
    %90 = arith.mulf %3, %89 : vector<1x128xf32>
    %91 = arith.addf %90, %4 : vector<1x128xf32>
    %92 = vector.extract_strided_slice %91 {offsets = [0, 0], sizes = [1, 32], strides = [1, 1]} : vector<1x128xf32> to vector<1x32xf32>
    %93 = vector.extract_strided_slice %91 {offsets = [0, 32], sizes = [1, 32], strides = [1, 1]} : vector<1x128xf32> to vector<1x32xf32>
    %94 = vector.extract_strided_slice %91 {offsets = [0, 64], sizes = [1, 32], strides = [1, 1]} : vector<1x128xf32> to vector<1x32xf32>
    %95 = vector.extract_strided_slice %91 {offsets = [0, 96], sizes = [1, 32], strides = [1, 1]} : vector<1x128xf32> to vector<1x32xf32>
    %96 = arith.mulf %93, %83 : vector<1x32xf32>
    %97 = arith.mulf %92, %94 : vector<1x32xf32>
    %98 = arith.addf %96, %97 : vector<1x32xf32>
    %99 = math.tanh %98 : vector<1x32xf32>
    %100 = arith.mulf %95, %99 : vector<1x32xf32>
    %101 = vector.extract_strided_slice %8 {offsets = [6, 0], sizes = [1, 128], strides = [1, 1]} : vector<8x128xf32> to vector<1x128xf32>
    %cst_15 = arith.constant dense<0.000000e+00> : vector<1x128xf32>
    %102 = tpu.matmul %100, %1, %cst_15 {dimension_numbers = #tpu.dot_dimension_numbers<[1], [0], [0], [1], [0, 0, 1, 1], [], []>} : vector<1x32xf32>, vector<32x128xf32>, vector<1x128xf32> -> vector<1x128xf32>
    %103 = arith.addf %101, %102 : vector<1x128xf32>
    %104 = math.tanh %103 : vector<1x128xf32>
    %105 = arith.mulf %3, %104 : vector<1x128xf32>
    %106 = arith.addf %105, %4 : vector<1x128xf32>
    %107 = vector.extract_strided_slice %106 {offsets = [0, 0], sizes = [1, 32], strides = [1, 1]} : vector<1x128xf32> to vector<1x32xf32>
    %108 = vector.extract_strided_slice %106 {offsets = [0, 32], sizes = [1, 32], strides = [1, 1]} : vector<1x128xf32> to vector<1x32xf32>
    %109 = vector.extract_strided_slice %106 {offsets = [0, 64], sizes = [1, 32], strides = [1, 1]} : vector<1x128xf32> to vector<1x32xf32>
    %110 = vector.extract_strided_slice %106 {offsets = [0, 96], sizes = [1, 32], strides = [1, 1]} : vector<1x128xf32> to vector<1x32xf32>
    %111 = arith.mulf %108, %98 : vector<1x32xf32>
    %112 = arith.mulf %107, %109 : vector<1x32xf32>
    %113 = arith.addf %111, %112 : vector<1x32xf32>
    %114 = math.tanh %113 : vector<1x32xf32>
    %115 = arith.mulf %110, %114 : vector<1x32xf32>
    %116 = vector.extract_strided_slice %8 {offsets = [7, 0], sizes = [1, 128], strides = [1, 1]} : vector<8x128xf32> to vector<1x128xf32>
    %cst_16 = arith.constant dense<0.000000e+00> : vector<1x128xf32>
    %117 = tpu.matmul %115, %1, %cst_16 {dimension_numbers = #tpu.dot_dimension_numbers<[1], [0], [0], [1], [0, 0, 1, 1], [], []>} : vector<1x32xf32>, vector<32x128xf32>, vector<1x128xf32> -> vector<1x128xf32>
    %118 = arith.addf %116, %117 : vector<1x128xf32>
    %119 = math.tanh %118 : vector<1x128xf32>
    %120 = arith.mulf %3, %119 : vector<1x128xf32>
    %121 = arith.addf %120, %4 : vector<1x128xf32>
    %122 = vector.extract_strided_slice %121 {offsets = [0, 0], sizes = [1, 32], strides = [1, 1]} : vector<1x128xf32> to vector<1x32xf32>
    %123 = vector.extract_strided_slice %121 {offsets = [0, 32], sizes = [1, 32], strides = [1, 1]} : vector<1x128xf32> to vector<1x32xf32>
    %124 = vector.extract_strided_slice %121 {offsets = [0, 64], sizes = [1, 32], strides = [1, 1]} : vector<1x128xf32> to vector<1x32xf32>
    %125 = vector.extract_strided_slice %121 {offsets = [0, 96], sizes = [1, 32], strides = [1, 1]} : vector<1x128xf32> to vector<1x32xf32>
    %126 = arith.mulf %123, %113 : vector<1x32xf32>
    %127 = arith.mulf %122, %124 : vector<1x32xf32>
    %128 = arith.addf %126, %127 : vector<1x32xf32>
    %129 = math.tanh %128 : vector<1x32xf32>
    %130 = arith.mulf %125, %129 : vector<1x32xf32>
    %131 = tpu.concatenate %25, %40, %55, %70, %85, %100, %115, %130 in 0 : vector<1x32xf32>, vector<1x32xf32>, vector<1x32xf32>, vector<1x32xf32>, vector<1x32xf32>, vector<1x32xf32>, vector<1x32xf32>, vector<1x32xf32> -> vector<8x32xf32>
    %c0_17 = arith.constant 0 : index
    %c0_18 = arith.constant 0 : index
    %132 = vector.load %arg3[%c0_17, %c0_18] : memref<33x8xf32, #tpu.memory_space<vmem>>, vector<32x8xf32>
    %c32 = arith.constant 32 : index
    %c0_19 = arith.constant 0 : index
    %133 = vector.load %arg3[%c32, %c0_19] : memref<33x8xf32, #tpu.memory_space<vmem>>, vector<1x8xf32>
    %cst_20 = arith.constant dense<0.000000e+00> : vector<8x8xf32>
    %134 = tpu.matmul %131, %132, %cst_20 {dimension_numbers = #tpu.dot_dimension_numbers<[1], [0], [0], [1], [0, 0, 1, 1], [], []>} : vector<8x32xf32>, vector<32x8xf32>, vector<8x8xf32> -> vector<8x8xf32>
    %135 = vector.broadcast %133 : vector<1x8xf32> to vector<8x8xf32>
    %136 = arith.addf %134, %135 : vector<8x8xf32>
    %cst_21 = arith.constant dense<0xFF800000> : vector<8xf32>
    %137 = vector.multi_reduction <maximumf>, %136, %cst_21 [1] : vector<8x8xf32> to vector<8xf32>
    %138 = vector.shape_cast %137 : vector<8xf32> to vector<8x1xf32>
    %139 = vector.broadcast %138 : vector<8x1xf32> to vector<8x8xf32>
    %140 = arith.subf %136, %139 : vector<8x8xf32>
    %141 = math.exp %140 : vector<8x8xf32>
    %cst_22 = arith.constant dense<0.000000e+00> : vector<8xf32>
    %142 = vector.multi_reduction <add>, %141, %cst_22 [1] : vector<8x8xf32> to vector<8xf32>
    %143 = vector.shape_cast %142 : vector<8xf32> to vector<8x1xf32>
    %144 = math.log %143 : vector<8x1xf32>
    %145 = arith.addf %144, %138 : vector<8x1xf32>
    %146 = vector.broadcast %145 : vector<8x1xf32> to vector<8x8xf32>
    %147 = arith.subf %136, %146 : vector<8x8xf32>
    %c0_23 = arith.constant 0 : index
    %c0_24 = arith.constant 0 : index
    %148 = vector.load %arg4[%c0_23, %c0_24] : memref<8x8xf32, #tpu.memory_space<vmem>>, vector<8x8xf32>
    tpu.vector_store %arg4[%c0_23, %c0_24], %147 {strides = array<i32>} : memref<8x8xf32, #tpu.memory_space<vmem>>, vector<8x8xf32>,
    return
  }
  func.func @transform_0(%arg0: i32) -> (i32, i32) {
    %c0_i32 = arith.constant 0 : i32
    %c0_i32_0 = arith.constant 0 : i32
    %c0_i32_1 = arith.constant 0 : i32
    return %c0_i32, %c0_i32_0 : i32, i32
  }
  func.func @transform_1(%arg0: i32) -> (i32, i32) {
    %c0_i32 = arith.constant 0 : i32
    %c0_i32_0 = arith.constant 0 : i32
    %c0_i32_1 = arith.constant 0 : i32
    return %c0_i32, %c0_i32_0 : i32, i32
  }
  func.func @transform_2(%arg0: i32) -> (i32, i32) {
    %c0_i32 = arith.constant 0 : i32
    %c0_i32_0 = arith.constant 0 : i32
    %c0_i32_1 = arith.constant 0 : i32
    return %c0_i32, %c0_i32_0 : i32, i32
  }
  func.func @transform_3(%arg0: i32) -> (i32, i32) {
    %c0_i32 = arith.constant 0 : i32
    %c0_i32_0 = arith.constant 0 : i32
    %c0_i32_1 = arith.constant 0 : i32
    return %c0_i32, %c0_i32_0 : i32, i32
  }
}

</mosaic_0001>

<llo_original>
// kernel: tpu_custom_call.1
$region0: #{tpu_custom_call.1}
  #allocation0 [shape = 'u32[]', space=smem, size = 0x4, offset = 0x4, fixed_abs, tag = 'smem constant byte address 0x4 - core index']
  #allocation1 [shape = 'u32[144,128]{1,0:T(1,128)}', space=vmem, size = 0x12000, scoped, tag = 'internal scratch']
  %s0 = inlined_call_operand.vmem [shape: f32[8,16], index: 0, kind: input, shape index: {}]
  %s1 = inlined_call_operand.hbm [shape: f32[51,128], index: 1, kind: input, shape index: {}]
  %s2 = inlined_call_operand.vmem [shape: f32[33,8], index: 2, kind: input, shape index: {}]
  %s3 = inlined_call_operand.hbm [shape: f32[8,8], index: 3, kind: output, shape index: {}]
  %s4 = sld [smem:[#allocation0]]
  $region26: #{tpu_custom_call.1} parent=0
    _
  %s6 = ssub.s32 1, %s4
  %s7 = scalar_select 0, %s6, %s4
  $region1: #{tpu_custom_call.1} parent=0
    #allocation2 [shape = 'u8[28672]{0}', space=vmem, size = 0x7000, scoped, tag = 'input window, operand 1, single buffered']
    #allocation3 [shape = 's32[1]{0}', space=sflag, size = 0x4, scoped, tag = 'scoped memory for tpu_custom_call.1']
    #allocation4 [shape = 's32[1]{0}', space=sflag, size = 0x4, scoped, tag = 'scoped memory for tpu_custom_call.1']
    #allocation5 [shape = 'u8[4096]{0}', space=vmem, size = 0x1000, scoped, tag = 'output window, operand 0, single buffered']
    %8 = vsyncpa [#allocation3], 0
    %9 = vsyncpa [#allocation4], 0
    // Predicated region
    $region2: #{tpu_custom_call.1} parent=1 // pred_check
      _
    $region3: #{tpu_custom_call.1} parent=1 // pred_check_branch
      %11 = sbr.rel (0) target = $region5
    $region4: #{tpu_custom_call.1} parent=1 // pred_region
      _
    $region5: #{tpu_custom_call.1} parent=1 // pred_fallthru
      _
    // Predicated region
    $region6: #{tpu_custom_call.1} parent=1 // pred_check
      _
    $region7: #{tpu_custom_call.1} parent=1 // pred_check_branch
      %13 = sbr.rel (0) target = $region9
    $region8: #{tpu_custom_call.1} parent=1 // pred_region
      %s15 = ssub.s32 896, 896
      %16 = vsyncadd [#allocation3], %s15
      %s17 = sshll.u32 [#allocation2], 4
      %s18 = int_to_ptr.vmem [resolvable:$true] %s17
      %23 = dma.hbm_to_vmem [thread:$0]  %s1, 896, %s18, [#allocation3], 128, 128, 8
    $region9: #{tpu_custom_call.1} parent=1 // pred_fallthru
      _
    // Predicated region
    $region10: #{tpu_custom_call.1} parent=1 // pred_check
      _
    $region11: #{tpu_custom_call.1} parent=1 // pred_check_branch
      %25 = sbr.rel (0) target = $region13
    $region12: #{tpu_custom_call.1} parent=1 // pred_region
      _
    $region13: #{tpu_custom_call.1} parent=1 // pred_fallthru
      _
    // Predicated region
    $region14: #{tpu_custom_call.1} parent=1 // pred_check
      _
    $region15: #{tpu_custom_call.1} parent=1 // pred_check_branch
      %27 = sbr.rel (0) target = $region17
    $region16: #{tpu_custom_call.1} parent=1 // pred_region
      %28 = dma.done [#allocation3], 896
    $region17: #{tpu_custom_call.1} parent=1 // pred_fallthru
      _
    %v29 = vld [vmem:[#allocation2] sm:$0xff]
    %v30 = vld [vmem:[#allocation2 + $0x8] sm:$0xff]
    %v31 = vld [vmem:[#allocation2 + $0x10] sm:$0xff]
    %v32 = vld [vmem:[#allocation2 + $0x18] sm:$0xff]
    %v33 = vld [vmem:[#allocation2 + $0x20] sm:$0xff]
    %v34 = vld [vmem:[#allocation2 + $0x28] sm:$0xff]
    %v35 = vld [vmem:[#allocation2 + $0x30] sm:$0x1]
    %v36 = vld [vmem:[#allocation2 + $0x31] sm:$0x1]
    %v37 = vld [vmem:[#allocation2 + $0x32] sm:$0x1]
    %v38 = vld [vmem:[%s0] sm:$0xff]
    %v39 = vlaneseq
    %v40 = vshrl.u32 %v39, 7
    %v41 = vsub.s32 0, %v40
    %v42 = vrot.slane %v35, %v41
    %vm43 = vcmask 130048
    %v45 = vsel %vm43, %v38, 0
    %47 = vmatprep.subr.mxu0 0.0
    %48 = vmatpush1.msra.mxu0 %v29
    %49 = vmatprep.subr.mxu0 0.0
    %50 = vmatpush1.msra.mxu0 %v30
    %51 = vmatprep.subr.mxu0 0.0
    %52 = vmatpush1.msra.mxu0 0.0
    %53 = vmatprep.subr.mxu0 0.0
    %54 = vmatpush1.msra.mxu0 0.0
    %55 = vmatprep.subr.mxu0 0.0
    %56 = vmatpush1.msra.mxu0 0.0
    %57 = vmatprep.subr.mxu0 0.0
    %58 = vmatpush1.msra.mxu0 0.0
    %59 = vmatprep.subr.mxu0 0.0
    %60 = vmatpush1.msra.mxu0 0.0
    %61 = vmatprep.subr.mxu0 0.0
    %62 = vmatpush1.msra.mxu0 0.0
    %63 = vmatprep.subr.mxu0 0.0
    %64 = vmatpush1.msra.mxu0 0.0
    %65 = vmatprep.subr.mxu0 0.0
    %66 = vmatpush1.msra.mxu0 0.0
    %67 = vmatprep.subr.mxu0 0.0
    %68 = vmatpush1.msra.mxu0 0.0
    %69 = vmatprep.subr.mxu0 0.0
    %70 = vmatpush1.msra.mxu0 0.0
    %71 = vmatprep.subr.mxu0 0.0
    %72 = vmatpush1.msra.mxu0 0.0
    %73 = vmatprep.subr.mxu0 0.0
    %74 = vmatpush1.msra.mxu0 0.0
    %75 = vmatprep.subr.mxu0 0.0
    %76 = vmatpush1.msra.mxu0 0.0
    %77 = vmatprep.subr.mxu0 0.0
    %78 = vmatpush1.msra.mxu0 0.0
    %79 = vmatprep.subr.mxu0 0.0
    %80 = vmatpush1.msra.mxu0 0.0
    %81 = vmatprep.subr.mxu0 0.0
    %82 = vmatpush1.msra.mxu0 0.0
    %83 = vmatprep.subr.mxu0 0.0
    %84 = vmatpush1.msra.mxu0 0.0
    %85 = vmatprep.subr.mxu0 0.0
    %86 = vmatpush1.msra.mxu0 0.0
    %87 = vmatprep.subr.mxu0 0.0
    %88 = vmatpush1.msra.mxu0 0.0
    %89 = vmatprep.subr.mxu0 0.0
    %90 = vmatpush1.msra.mxu0 0.0
    %91 = vmatprep.subr.mxu0 0.0
    %92 = vmatpush1.msra.mxu0 0.0
    %93 = vmatprep.subr.mxu0 0.0
    %94 = vmatpush1.msra.mxu0 0.0
    %95 = vmatprep.subr.mxu0 0.0
    %96 = vmatpush1.msra.mxu0 0.0
    %97 = vmatprep.subr.mxu0 0.0
    %98 = vmatpush1.msra.mxu0 0.0
    %99 = vmatprep.subr.mxu0 0.0
    %100 = vmatpush1.msra.mxu0 0.0
    %101 = vmatprep.subr.mxu0 0.0
    %102 = vmatpush1.msra.mxu0 0.0
    %103 = vmatprep.subr.mxu0 0.0
    %104 = vmatpush1.msra.mxu0 0.0
    %105 = vmatprep.subr.mxu0 0.0
    %106 = vmatpush1.msra.mxu0 0.0
    %107 = vmatprep.subr.mxu0 0.0
    %108 = vmatpush1.msra.mxu0 0.0
    %109 = vmatprep.subr.mxu0 0.0
    %110 = vmatpush1.msra.mxu0 0.0
    %111 = vmatprep.mubr.f32.mxu0 0.0
    %112 = vmatmul.mubr.f32.gmra.mrb[0].mxu0 %v45
    %v113 = vpop.f32.mrb[0].mxu0
    %v114 = vadd.f32 %v42, %v113
    %v115 = vpop.f32.mrb[0].mxu0
    %116 = vdwg.mxu0
    %vm117 = vcmask 261120
    %v119 = vsel %vm117, 0.0, 0
    %121 = vmatprep.subr.mxu0 0.0
    %122 = vmatpush1.msra.mxu0 %v31
    %123 = vmatprep.subr.mxu0 0.0
    %124 = vmatpush1.msra.mxu0 %v32
    %125 = vmatprep.subr.mxu0 0.0
    %126 = vmatpush1.msra.mxu0 %v33
    %127 = vmatprep.subr.mxu0 0.0
    %128 = vmatpush1.msra.mxu0 %v34
    %129 = vmatprep.subr.mxu0 0.0
    %130 = vmatpush1.msra.mxu0 0.0
    %131 = vmatprep.subr.mxu0 0.0
    %132 = vmatpush1.msra.mxu0 0.0
    %133 = vmatprep.subr.mxu0 0.0
    %134 = vmatpush1.msra.mxu0 0.0
    %135 = vmatprep.subr.mxu0 0.0
    %136 = vmatpush1.msra.mxu0 0.0
    %137 = vmatprep.subr.mxu0 0.0
    %138 = vmatpush1.msra.mxu0 0.0
    %139 = vmatprep.subr.mxu0 0.0
    %140 = vmatpush1.msra.mxu0 0.0
    %141 = vmatprep.subr.mxu0 0.0
    %142 = vmatpush1.msra.mxu0 0.0
    %143 = vmatprep.subr.mxu0 0.0
    %144 = vmatpush1.msra.mxu0 0.0
    %145 = vmatprep.subr.mxu0 0.0
    %146 = vmatpush1.msra.mxu0 0.0
    %147 = vmatprep.subr.mxu0 0.0
    %148 = vmatpush1.msra.mxu0 0.0
    %149 = vmatprep.subr.mxu0 0.0
    %150 = vmatpush1.msra.mxu0 0.0
    %151 = vmatprep.subr.mxu0 0.0
    %152 = vmatpush1.msra.mxu0 0.0
    %153 = vmatprep.subr.mxu0 0.0
    %154 = vmatpush1.msra.mxu0 0.0
    %155 = vmatprep.subr.mxu0 0.0
    %156 = vmatpush1.msra.mxu0 0.0
    %157 = vmatprep.subr.mxu0 0.0
    %158 = vmatpush1.msra.mxu0 0.0
    %159 = vmatprep.subr.mxu0 0.0
    %160 = vmatpush1.msra.mxu0 0.0
    %161 = vmatprep.subr.mxu0 0.0
    %162 = vmatpush1.msra.mxu0 0.0
    %163 = vmatprep.subr.mxu0 0.0
    %164 = vmatpush1.msra.mxu0 0.0
    %165 = vmatprep.subr.mxu0 0.0
    %166 = vmatpush1.msra.mxu0 0.0
    %167 = vmatprep.subr.mxu0 0.0
    %168 = vmatpush1.msra.mxu0 0.0
    %169 = vmatprep.subr.mxu0 0.0
    %170 = vmatpush1.msra.mxu0 0.0
    %171 = vmatprep.subr.mxu0 0.0
    %172 = vmatpush1.msra.mxu0 0.0
    %173 = vmatprep.subr.mxu0 0.0
    %174 = vmatpush1.msra.mxu0 0.0
    %175 = vmatprep.subr.mxu0 0.0
    %176 = vmatpush1.msra.mxu0 0.0
    %177 = vmatprep.subr.mxu0 0.0
    %178 = vmatpush1.msra.mxu0 0.0
    %179 = vmatprep.subr.mxu0 0.0
    %180 = vmatpush1.msra.mxu0 0.0
    %181 = vmatprep.subr.mxu0 0.0
    %182 = vmatpush1.msra.mxu0 0.0
    %183 = vmatprep.subr.mxu0 0.0
    %184 = vmatpush1.msra.mxu0 0.0
    %185 = vmatprep.mubr.f32.mxu0 0.0
    %186 = vmatmul.mubr.f32.gmra.mrb[0].mxu0 %v119
    %v187 = vpop.f32.mrb[0].mxu0
    %v188 = vadd.f32 0.0, %v187
    %v189 = vpop.f32.mrb[0].mxu0
    %190 = vdwg.mxu0
    %v191 = vadd.f32 %v114, %v188
    %v192 = vtanh.pop %v191
    %v193 = vmul.f32 %v36, %v192
    %v194 = vadd.f32 %v193, %v37
    %v195 = vmul.f32 %v194, 0.0
    %197 = vrot.lane.b32.xlu0 %v194, 64
    %v198 = vpop.permute.xlu0 %197
    %v200 = vmul.f32 %v194, %v198
    %202 = vrot.lane.b32.xlu0 %v200, 32
    %v203 = vpop.permute.xlu0 %202
    %v205 = vadd.f32 %v195, %v203
    %v206 = vtanh.pop %v205
    %208 = vrot.lane.b32.xlu0 %v206, 64
    %v209 = vpop.permute.xlu0 %208
    %v211 = vmul.f32 %v194, %v209
    %213 = vrot.lane.b32.xlu0 %v211, 32
    %v214 = vpop.permute.xlu0 %213
    %v215 = vsel %vm117, %v214, 0
    %217 = vmatprep.subr.mxu0 0.0
    %218 = vmatpush1.msra.mxu0 %v31
    %219 = vmatprep.subr.mxu0 0.0
    %220 = vmatpush1.msra.mxu0 %v32
    %221 = vmatprep.subr.mxu0 0.0
    %222 = vmatpush1.msra.mxu0 %v33
    %223 = vmatprep.subr.mxu0 0.0
    %224 = vmatpush1.msra.mxu0 %v34
    %225 = vmatprep.subr.mxu0 0.0
    %226 = vmatpush1.msra.mxu0 0.0
    %227 = vmatprep.subr.mxu0 0.0
    %228 = vmatpush1.msra.mxu0 0.0
    %229 = vmatprep.subr.mxu0 0.0
    %230 = vmatpush1.msra.mxu0 0.0
    %231 = vmatprep.subr.mxu0 0.0
    %232 = vmatpush1.msra.mxu0 0.0
    %233 = vmatprep.subr.mxu0 0.0
    %234 = vmatpush1.msra.mxu0 0.0
    %235 = vmatprep.subr.mxu0 0.0
    %236 = vmatpush1.msra.mxu0 0.0
    %237 = vmatprep.subr.mxu0 0.0
    %238 = vmatpush1.msra.mxu0 0.0
    %239 = vmatprep.subr.mxu0 0.0
    %240 = vmatpush1.msra.mxu0 0.0
    %241 = vmatprep.subr.mxu0 0.0
    %242 = vmatpush1.msra.mxu0 0.0
    %243 = vmatprep.subr.mxu0 0.0
    %244 = vmatpush1.msra.mxu0 0.0
    %245 = vmatprep.subr.mxu0 0.0
    %246 = vmatpush1.msra.mxu0 0.0
    %247 = vmatprep.subr.mxu0 0.0
    %248 = vmatpush1.msra.mxu0 0.0
    %249 = vmatprep.subr.mxu0 0.0
    %250 = vmatpush1.msra.mxu0 0.0
    %251 = vmatprep.subr.mxu0 0.0
    %252 = vmatpush1.msra.mxu0 0.0
    %253 = vmatprep.subr.mxu0 0.0
    %254 = vmatpush1.msra.mxu0 0.0
    %255 = vmatprep.subr.mxu0 0.0
    %256 = vmatpush1.msra.mxu0 0.0
    %257 = vmatprep.subr.mxu0 0.0
    %258 = vmatpush1.msra.mxu0 0.0
    %259 = vmatprep.subr.mxu0 0.0
    %260 = vmatpush1.msra.mxu0 0.0
    %261 = vmatprep.subr.mxu0 0.0
    %262 = vmatpush1.msra.mxu0 0.0
    %263 = vmatprep.subr.mxu0 0.0
    %264 = vmatpush1.msra.mxu0 0.0
    %265 = vmatprep.subr.mxu0 0.0
    %266 = vmatpush1.msra.mxu0 0.0
    %267 = vmatprep.subr.mxu0 0.0
    %268 = vmatpush1.msra.mxu0 0.0
    %269 = vmatprep.subr.mxu0 0.0
    %270 = vmatpush1.msra.mxu0 0.0
    %271 = vmatprep.subr.mxu0 0.0
    %272 = vmatpush1.msra.mxu0 0.0
    %273 = vmatprep.subr.mxu0 0.0
    %274 = vmatpush1.msra.mxu0 0.0
    %275 = vmatprep.subr.mxu0 0.0
    %276 = vmatpush1.msra.mxu0 0.0
    %277 = vmatprep.subr.mxu0 0.0
    %278 = vmatpush1.msra.mxu0 0.0
    %279 = vmatprep.subr.mxu0 0.0
    %280 = vmatpush1.msra.mxu0 0.0
    %281 = vmatprep.mubr.f32.mxu0 0.0
    %282 = vmatmul.mubr.f32.gmra.mrb[0].mxu0 %v215
    %v283 = vpop.f32.mrb[0].mxu0
    %v284 = vadd.f32 0.0, %v283
    %v285 = vpop.f32.mrb[0].mxu0
    %286 = vdwg.mxu0
    %v288 = vrot.slane %v284, 7
    %v290 = vadd.f32 %v114, %v288
    %v291 = vtanh.pop %v290
    %v293 = vrot.slane %v291, 1
    %v295 = vmul.f32 %v36, %v293
    %v296 = vadd.f32 %v295, %v37
    %v297 = vmul.f32 %v296, %v205
    %299 = vrot.lane.b32.xlu0 %v296, 64
    %v300 = vpop.permute.xlu0 %299
    %v302 = vmul.f32 %v296, %v300
    %304 = vrot.lane.b32.xlu0 %v302, 32
    %v305 = vpop.permute.xlu0 %304
    %v307 = vadd.f32 %v297, %v305
    %v308 = vtanh.pop %v307
    %310 = vrot.lane.b32.xlu0 %v308, 64
    %v311 = vpop.permute.xlu0 %310
    %v313 = vmul.f32 %v296, %v311
    %315 = vrot.lane.b32.xlu0 %v313, 32
    %v316 = vpop.permute.xlu0 %315
    %v317 = vsel %vm117, %v316, 0
    %319 = vmatprep.subr.mxu0 0.0
    %320 = vmatpush1.msra.mxu0 %v31
    %321 = vmatprep.subr.mxu0 0.0
    %322 = vmatpush1.msra.mxu0 %v32
    %323 = vmatprep.subr.mxu0 0.0
    %324 = vmatpush1.msra.mxu0 %v33
    %325 = vmatprep.subr.mxu0 0.0
    %326 = vmatpush1.msra.mxu0 %v34
    %327 = vmatprep.subr.mxu0 0.0
    %328 = vmatpush1.msra.mxu0 0.0
    %329 = vmatprep.subr.mxu0 0.0
    %330 = vmatpush1.msra.mxu0 0.0
    %331 = vmatprep.subr.mxu0 0.0
    %332 = vmatpush1.msra.mxu0 0.0
    %333 = vmatprep.subr.mxu0 0.0
    %334 = vmatpush1.msra.mxu0 0.0
    %335 = vmatprep.subr.mxu0 0.0
    %336 = vmatpush1.msra.mxu0 0.0
    %337 = vmatprep.subr.mxu0 0.0
    %338 = vmatpush1.msra.mxu0 0.0
    %339 = vmatprep.subr.mxu0 0.0
    %340 = vmatpush1.msra.mxu0 0.0
    %341 = vmatprep.subr.mxu0 0.0
    %342 = vmatpush1.msra.mxu0 0.0
    %343 = vmatprep.subr.mxu0 0.0
    %344 = vmatpush1.msra.mxu0 0.0
    %345 = vmatprep.subr.mxu0 0.0
    %346 = vmatpush1.msra.mxu0 0.0
    %347 = vmatprep.subr.mxu0 0.0
    %348 = vmatpush1.msra.mxu0 0.0
    %349 = vmatprep.subr.mxu0 0.0
    %350 = vmatpush1.msra.mxu0 0.0
    %351 = vmatprep.subr.mxu0 0.0
    %352 = vmatpush1.msra.mxu0 0.0
    %353 = vmatprep.subr.mxu0 0.0
    %354 = vmatpush1.msra.mxu0 0.0
    %355 = vmatprep.subr.mxu0 0.0
    %356 = vmatpush1.msra.mxu0 0.0
    %357 = vmatprep.subr.mxu0 0.0
    %358 = vmatpush1.msra.mxu0 0.0
    %359 = vmatprep.subr.mxu0 0.0
    %360 = vmatpush1.msra.mxu0 0.0
    %361 = vmatprep.subr.mxu0 0.0
    %362 = vmatpush1.msra.mxu0 0.0
    %363 = vmatprep.subr.mxu0 0.0
    %364 = vmatpush1.msra.mxu0 0.0
    %365 = vmatprep.subr.mxu0 0.0
    %366 = vmatpush1.msra.mxu0 0.0
    %367 = vmatprep.subr.mxu0 0.0
    %368 = vmatpush1.msra.mxu0 0.0
    %369 = vmatprep.subr.mxu0 0.0
    %370 = vmatpush1.msra.mxu0 0.0
    %371 = vmatprep.subr.mxu0 0.0
    %372 = vmatpush1.msra.mxu0 0.0
    %373 = vmatprep.subr.mxu0 0.0
    %374 = vmatpush1.msra.mxu0 0.0
    %375 = vmatprep.subr.mxu0 0.0
    %376 = vmatpush1.msra.mxu0 0.0
    %377 = vmatprep.subr.mxu0 0.0
    %378 = vmatpush1.msra.mxu0 0.0
    %379 = vmatprep.subr.mxu0 0.0
    %380 = vmatpush1.msra.mxu0 0.0
    %381 = vmatprep.subr.mxu0 0.0
    %382 = vmatpush1.msra.mxu0 0.0
    %383 = vmatprep.mubr.f32.mxu0 0.0
    %384 = vmatmul.mubr.f32.gmra.mrb[0].mxu0 %v317
    %v385 = vpop.f32.mrb[0].mxu0
    %v386 = vadd.f32 0.0, %v385
    %v387 = vpop.f32.mrb[0].mxu0
    %388 = vdwg.mxu0
    %v390 = vrot.slane %v386, 6
    %v392 = vadd.f32 %v114, %v390
    %v393 = vtanh.pop %v392
    %v395 = vrot.slane %v393, 2
    %v397 = vmul.f32 %v36, %v395
    %v398 = vadd.f32 %v397, %v37
    %v399 = vmul.f32 %v398, %v307
    %401 = vrot.lane.b32.xlu0 %v398, 64
    %v402 = vpop.permute.xlu0 %401
    %v404 = vmul.f32 %v398, %v402
    %406 = vrot.lane.b32.xlu0 %v404, 32
    %v407 = vpop.permute.xlu0 %406
    %v409 = vadd.f32 %v399, %v407
    %v410 = vtanh.pop %v409
    %412 = vrot.lane.b32.xlu0 %v410, 64
    %v413 = vpop.permute.xlu0 %412
    %v415 = vmul.f32 %v398, %v413
    %417 = vrot.lane.b32.xlu0 %v415, 32
    %v418 = vpop.permute.xlu0 %417
    %v419 = vsel %vm117, %v418, 0
    %421 = vmatprep.subr.mxu0 0.0
    %422 = vmatpush1.msra.mxu0 %v31
    %423 = vmatprep.subr.mxu0 0.0
    %424 = vmatpush1.msra.mxu0 %v32
    %425 = vmatprep.subr.mxu0 0.0
    %426 = vmatpush1.msra.mxu0 %v33
    %427 = vmatprep.subr.mxu0 0.0
    %428 = vmatpush1.msra.mxu0 %v34
    %429 = vmatprep.subr.mxu0 0.0
    %430 = vmatpush1.msra.mxu0 0.0
    %431 = vmatprep.subr.mxu0 0.0
    %432 = vmatpush1.msra.mxu0 0.0
    %433 = vmatprep.subr.mxu0 0.0
    %434 = vmatpush1.msra.mxu0 0.0
    %435 = vmatprep.subr.mxu0 0.0
    %436 = vmatpush1.msra.mxu0 0.0
    %437 = vmatprep.subr.mxu0 0.0
    %438 = vmatpush1.msra.mxu0 0.0
    %439 = vmatprep.subr.mxu0 0.0
    %440 = vmatpush1.msra.mxu0 0.0
    %441 = vmatprep.subr.mxu0 0.0
    %442 = vmatpush1.msra.mxu0 0.0
    %443 = vmatprep.subr.mxu0 0.0
    %444 = vmatpush1.msra.mxu0 0.0
    %445 = vmatprep.subr.mxu0 0.0
    %446 = vmatpush1.msra.mxu0 0.0
    %447 = vmatprep.subr.mxu0 0.0
    %448 = vmatpush1.msra.mxu0 0.0
    %449 = vmatprep.subr.mxu0 0.0
    %450 = vmatpush1.msra.mxu0 0.0
    %451 = vmatprep.subr.mxu0 0.0
    %452 = vmatpush1.msra.mxu0 0.0
    %453 = vmatprep.subr.mxu0 0.0
    %454 = vmatpush1.msra.mxu0 0.0
    %455 = vmatprep.subr.mxu0 0.0
    %456 = vmatpush1.msra.mxu0 0.0
    %457 = vmatprep.subr.mxu0 0.0
    %458 = vmatpush1.msra.mxu0 0.0
    %459 = vmatprep.subr.mxu0 0.0
    %460 = vmatpush1.msra.mxu0 0.0
    %461 = vmatprep.subr.mxu0 0.0
    %462 = vmatpush1.msra.mxu0 0.0
    %463 = vmatprep.subr.mxu0 0.0
    %464 = vmatpush1.msra.mxu0 0.0
    %465 = vmatprep.subr.mxu0 0.0
    %466 = vmatpush1.msra.mxu0 0.0
    %467 = vmatprep.subr.mxu0 0.0
    %468 = vmatpush1.msra.mxu0 0.0
    %469 = vmatprep.subr.mxu0 0.0
    %470 = vmatpush1.msra.mxu0 0.0
    %471 = vmatprep.subr.mxu0 0.0
    %472 = vmatpush1.msra.mxu0 0.0
    %473 = vmatprep.subr.mxu0 0.0
    %474 = vmatpush1.msra.mxu0 0.0
    %475 = vmatprep.subr.mxu0 0.0
    %476 = vmatpush1.msra.mxu0 0.0
    %477 = vmatprep.subr.mxu0 0.0
    %478 = vmatpush1.msra.mxu0 0.0
    %479 = vmatprep.subr.mxu0 0.0
    %480 = vmatpush1.msra.mxu0 0.0
    %481 = vmatprep.subr.mxu0 0.0
    %482 = vmatpush1.msra.mxu0 0.0
    %483 = vmatprep.subr.mxu0 0.0
    %484 = vmatpush1.msra.mxu0 0.0
    %485 = vmatprep.mubr.f32.mxu0 0.0
    %486 = vmatmul.mubr.f32.gmra.mrb[0].mxu0 %v419
    %v487 = vpop.f32.mrb[0].mxu0
    %v488 = vadd.f32 0.0, %v487
    %v489 = vpop.f32.mrb[0].mxu0
    %490 = vdwg.mxu0
    %v492 = vrot.slane %v488, 5
    %v494 = vadd.f32 %v114, %v492
    %v495 = vtanh.pop %v494
    %v497 = vrot.slane %v495, 3
    %v499 = vmul.f32 %v36, %v497
    %v500 = vadd.f32 %v499, %v37
    %v501 = vmul.f32 %v500, %v409
    %503 = vrot.lane.b32.xlu0 %v500, 64
    %v504 = vpop.permute.xlu0 %503
    %v506 = vmul.f32 %v500, %v504
    %508 = vrot.lane.b32.xlu0 %v506, 32
    %v509 = vpop.permute.xlu0 %508
    %v511 = vadd.f32 %v501, %v509
    %v512 = vtanh.pop %v511
    %514 = vrot.lane.b32.xlu0 %v512, 64
    %v515 = vpop.permute.xlu0 %514
    %v517 = vmul.f32 %v500, %v515
    %519 = vrot.lane.b32.xlu0 %v517, 32
    %v520 = vpop.permute.xlu0 %519
    %v521 = vsel %vm117, %v520, 0
    %523 = vmatprep.subr.mxu0 0.0
    %524 = vmatpush1.msra.mxu0 %v31
    %525 = vmatprep.subr.mxu0 0.0
    %526 = vmatpush1.msra.mxu0 %v32
    %527 = vmatprep.subr.mxu0 0.0
    %528 = vmatpush1.msra.mxu0 %v33
    %529 = vmatprep.subr.mxu0 0.0
    %530 = vmatpush1.msra.mxu0 %v34
    %531 = vmatprep.subr.mxu0 0.0
    %532 = vmatpush1.msra.mxu0 0.0
    %533 = vmatprep.subr.mxu0 0.0
    %534 = vmatpush1.msra.mxu0 0.0
    %535 = vmatprep.subr.mxu0 0.0
    %536 = vmatpush1.msra.mxu0 0.0
    %537 = vmatprep.subr.mxu0 0.0
    %538 = vmatpush1.msra.mxu0 0.0
    %539 = vmatprep.subr.mxu0 0.0
    %540 = vmatpush1.msra.mxu0 0.0
    %541 = vmatprep.subr.mxu0 0.0
    %542 = vmatpush1.msra.mxu0 0.0
    %543 = vmatprep.subr.mxu0 0.0
    %544 = vmatpush1.msra.mxu0 0.0
    %545 = vmatprep.subr.mxu0 0.0
    %546 = vmatpush1.msra.mxu0 0.0
    %547 = vmatprep.subr.mxu0 0.0
    %548 = vmatpush1.msra.mxu0 0.0
    %549 = vmatprep.subr.mxu0 0.0
    %550 = vmatpush1.msra.mxu0 0.0
    %551 = vmatprep.subr.mxu0 0.0
    %552 = vmatpush1.msra.mxu0 0.0
    %553 = vmatprep.subr.mxu0 0.0
    %554 = vmatpush1.msra.mxu0 0.0
    %555 = vmatprep.subr.mxu0 0.0
    %556 = vmatpush1.msra.mxu0 0.0
    %557 = vmatprep.subr.mxu0 0.0
    %558 = vmatpush1.msra.mxu0 0.0
    %559 = vmatprep.subr.mxu0 0.0
    %560 = vmatpush1.msra.mxu0 0.0
    %561 = vmatprep.subr.mxu0 0.0
    %562 = vmatpush1.msra.mxu0 0.0
    %563 = vmatprep.subr.mxu0 0.0
    %564 = vmatpush1.msra.mxu0 0.0
    %565 = vmatprep.subr.mxu0 0.0
    %566 = vmatpush1.msra.mxu0 0.0
    %567 = vmatprep.subr.mxu0 0.0
    %568 = vmatpush1.msra.mxu0 0.0
    %569 = vmatprep.subr.mxu0 0.0
    %570 = vmatpush1.msra.mxu0 0.0
    %571 = vmatprep.subr.mxu0 0.0
    %572 = vmatpush1.msra.mxu0 0.0
    %573 = vmatprep.subr.mxu0 0.0
    %574 = vmatpush1.msra.mxu0 0.0
    %575 = vmatprep.subr.mxu0 0.0
    %576 = vmatpush1.msra.mxu0 0.0
    %577 = vmatprep.subr.mxu0 0.0
    %578 = vmatpush1.msra.mxu0 0.0
    %579 = vmatprep.subr.mxu0 0.0
    %580 = vmatpush1.msra.mxu0 0.0
    %581 = vmatprep.subr.mxu0 0.0
    %582 = vmatpush1.msra.mxu0 0.0
    %583 = vmatprep.subr.mxu0 0.0
    %584 = vmatpush1.msra.mxu0 0.0
    %585 = vmatprep.subr.mxu0 0.0
    %586 = vmatpush1.msra.mxu0 0.0
    %587 = vmatprep.mubr.f32.mxu0 0.0
    %588 = vmatmul.mubr.f32.gmra.mrb[0].mxu0 %v521
    %v589 = vpop.f32.mrb[0].mxu0
    %v590 = vadd.f32 0.0, %v589
    %v591 = vpop.f32.mrb[0].mxu0
    %592 = vdwg.mxu0
    %v594 = vrot.slane %v590, 4
    %v596 = vadd.f32 %v114, %v594
    %v597 = vtanh.pop %v596
    %v599 = vrot.slane %v597, 4
    %v601 = vmul.f32 %v36, %v599
    %v602 = vadd.f32 %v601, %v37
    %v603 = vmul.f32 %v602, %v511
    %605 = vrot.lane.b32.xlu0 %v602, 64
    %v606 = vpop.permute.xlu0 %605
    %v608 = vmul.f32 %v602, %v606
    %610 = vrot.lane.b32.xlu0 %v608, 32
    %v611 = vpop.permute.xlu0 %610
    %v613 = vadd.f32 %v603, %v611
    %v614 = vtanh.pop %v613
    %616 = vrot.lane.b32.xlu0 %v614, 64
    %v617 = vpop.permute.xlu0 %616
    %v619 = vmul.f32 %v602, %v617
    %621 = vrot.lane.b32.xlu0 %v619, 32
    %v622 = vpop.permute.xlu0 %621
    %v623 = vsel %vm117, %v622, 0
    %625 = vmatprep.subr.mxu0 0.0
    %626 = vmatpush1.msra.mxu0 %v31
    %627 = vmatprep.subr.mxu0 0.0
    %628 = vmatpush1.msra.mxu0 %v32
    %629 = vmatprep.subr.mxu0 0.0
    %630 = vmatpush1.msra.mxu0 %v33
    %631 = vmatprep.subr.mxu0 0.0
    %632 = vmatpush1.msra.mxu0 %v34
    %633 = vmatprep.subr.mxu0 0.0
    %634 = vmatpush1.msra.mxu0 0.0
    %635 = vmatprep.subr.mxu0 0.0
    %636 = vmatpush1.msra.mxu0 0.0
    %637 = vmatprep.subr.mxu0 0.0
    %638 = vmatpush1.msra.mxu0 0.0
    %639 = vmatprep.subr.mxu0 0.0
    %640 = vmatpush1.msra.mxu0 0.0
    %641 = vmatprep.subr.mxu0 0.0
    %642 = vmatpush1.msra.mxu0 0.0
    %643 = vmatprep.subr.mxu0 0.0
    %644 = vmatpush1.msra.mxu0 0.0
    %645 = vmatprep.subr.mxu0 0.0
    %646 = vmatpush1.msra.mxu0 0.0
    %647 = vmatprep.subr.mxu0 0.0
    %648 = vmatpush1.msra.mxu0 0.0
    %649 = vmatprep.subr.mxu0 0.0
    %650 = vmatpush1.msra.mxu0 0.0
    %651 = vmatprep.subr.mxu0 0.0
    %652 = vmatpush1.msra.mxu0 0.0
    %653 = vmatprep.subr.mxu0 0.0
    %654 = vmatpush1.msra.mxu0 0.0
    %655 = vmatprep.subr.mxu0 0.0
    %656 = vmatpush1.msra.mxu0 0.0
    %657 = vmatprep.subr.mxu0 0.0
    %658 = vmatpush1.msra.mxu0 0.0
    %659 = vmatprep.subr.mxu0 0.0
    %660 = vmatpush1.msra.mxu0 0.0
    %661 = vmatprep.subr.mxu0 0.0
    %662 = vmatpush1.msra.mxu0 0.0
    %663 = vmatprep.subr.mxu0 0.0
    %664 = vmatpush1.msra.mxu0 0.0
    %665 = vmatprep.subr.mxu0 0.0
    %666 = vmatpush1.msra.mxu0 0.0
    %667 = vmatprep.subr.mxu0 0.0
    %668 = vmatpush1.msra.mxu0 0.0
    %669 = vmatprep.subr.mxu0 0.0
    %670 = vmatpush1.msra.mxu0 0.0
    %671 = vmatprep.subr.mxu0 0.0
    %672 = vmatpush1.msra.mxu0 0.0
    %673 = vmatprep.subr.mxu0 0.0
    %674 = vmatpush1.msra.mxu0 0.0
    %675 = vmatprep.subr.mxu0 0.0
    %676 = vmatpush1.msra.mxu0 0.0
    %677 = vmatprep.subr.mxu0 0.0
    %678 = vmatpush1.msra.mxu0 0.0
    %679 = vmatprep.subr.mxu0 0.0
    %680 = vmatpush1.msra.mxu0 0.0
    %681 = vmatprep.subr.mxu0 0.0
    %682 = vmatpush1.msra.mxu0 0.0
    %683 = vmatprep.subr.mxu0 0.0
    %684 = vmatpush1.msra.mxu0 0.0
    %685 = vmatprep.subr.mxu0 0.0
    %686 = vmatpush1.msra.mxu0 0.0
    %687 = vmatprep.subr.mxu0 0.0
    %688 = vmatpush1.msra.mxu0 0.0
    %689 = vmatprep.mubr.f32.mxu0 0.0
    %690 = vmatmul.mubr.f32.gmra.mrb[0].mxu0 %v623
    %v691 = vpop.f32.mrb[0].mxu0
    %v692 = vadd.f32 0.0, %v691
    %v693 = vpop.f32.mrb[0].mxu0
    %694 = vdwg.mxu0
    %v696 = vrot.slane %v692, 3
    %v698 = vadd.f32 %v114, %v696
    %v699 = vtanh.pop %v698
    %v701 = vrot.slane %v699, 5
    %v703 = vmul.f32 %v36, %v701
    %v704 = vadd.f32 %v703, %v37
    %v705 = vmul.f32 %v704, %v613
    %707 = vrot.lane.b32.xlu0 %v704, 64
    %v708 = vpop.permute.xlu0 %707
    %v710 = vmul.f32 %v704, %v708
    %712 = vrot.lane.b32.xlu0 %v710, 32
    %v713 = vpop.permute.xlu0 %712
    %v715 = vadd.f32 %v705, %v713
    %v716 = vtanh.pop %v715
    %718 = vrot.lane.b32.xlu0 %v716, 64
    %v719 = vpop.permute.xlu0 %718
    %v721 = vmul.f32 %v704, %v719
    %723 = vrot.lane.b32.xlu0 %v721, 32
    %v724 = vpop.permute.xlu0 %723
    %v725 = vsel %vm117, %v724, 0
    %727 = vmatprep.subr.mxu0 0.0
    %728 = vmatpush1.msra.mxu0 %v31
    %729 = vmatprep.subr.mxu0 0.0
    %730 = vmatpush1.msra.mxu0 %v32
    %731 = vmatprep.subr.mxu0 0.0
    %732 = vmatpush1.msra.mxu0 %v33
    %733 = vmatprep.subr.mxu0 0.0
    %734 = vmatpush1.msra.mxu0 %v34
    %735 = vmatprep.subr.mxu0 0.0
    %736 = vmatpush1.msra.mxu0 0.0
    %737 = vmatprep.subr.mxu0 0.0
    %738 = vmatpush1.msra.mxu0 0.0
    %739 = vmatprep.subr.mxu0 0.0
    %740 = vmatpush1.msra.mxu0 0.0
    %741 = vmatprep.subr.mxu0 0.0
    %742 = vmatpush1.msra.mxu0 0.0
    %743 = vmatprep.subr.mxu0 0.0
    %744 = vmatpush1.msra.mxu0 0.0
    %745 = vmatprep.subr.mxu0 0.0
    %746 = vmatpush1.msra.mxu0 0.0
    %747 = vmatprep.subr.mxu0 0.0
    %748 = vmatpush1.msra.mxu0 0.0
    %749 = vmatprep.subr.mxu0 0.0
    %750 = vmatpush1.msra.mxu0 0.0
    %751 = vmatprep.subr.mxu0 0.0
    %752 = vmatpush1.msra.mxu0 0.0
    %753 = vmatprep.subr.mxu0 0.0
    %754 = vmatpush1.msra.mxu0 0.0
    %755 = vmatprep.subr.mxu0 0.0
    %756 = vmatpush1.msra.mxu0 0.0
    %757 = vmatprep.subr.mxu0 0.0
    %758 = vmatpush1.msra.mxu0 0.0
    %759 = vmatprep.subr.mxu0 0.0
    %760 = vmatpush1.msra.mxu0 0.0
    %761 = vmatprep.subr.mxu0 0.0
    %762 = vmatpush1.msra.mxu0 0.0
    %763 = vmatprep.subr.mxu0 0.0
    %764 = vmatpush1.msra.mxu0 0.0
    %765 = vmatprep.subr.mxu0 0.0
    %766 = vmatpush1.msra.mxu0 0.0
    %767 = vmatprep.subr.mxu0 0.0
    %768 = vmatpush1.msra.mxu0 0.0
    %769 = vmatprep.subr.mxu0 0.0
    %770 = vmatpush1.msra.mxu0 0.0
    %771 = vmatprep.subr.mxu0 0.0
    %772 = vmatpush1.msra.mxu0 0.0
    %773 = vmatprep.subr.mxu0 0.0
    %774 = vmatpush1.msra.mxu0 0.0
    %775 = vmatprep.subr.mxu0 0.0
    %776 = vmatpush1.msra.mxu0 0.0
    %777 = vmatprep.subr.mxu0 0.0
    %778 = vmatpush1.msra.mxu0 0.0
    %779 = vmatprep.subr.mxu0 0.0
    %780 = vmatpush1.msra.mxu0 0.0
    %781 = vmatprep.subr.mxu0 0.0
    %782 = vmatpush1.msra.mxu0 0.0
    %783 = vmatprep.subr.mxu0 0.0
    %784 = vmatpush1.msra.mxu0 0.0
    %785 = vmatprep.subr.mxu0 0.0
    %786 = vmatpush1.msra.mxu0 0.0
    %787 = vmatprep.subr.mxu0 0.0
    %788 = vmatpush1.msra.mxu0 0.0
    %789 = vmatprep.subr.mxu0 0.0
    %790 = vmatpush1.msra.mxu0 0.0
    %791 = vmatprep.mubr.f32.mxu0 0.0
    %792 = vmatmul.mubr.f32.gmra.mrb[0].mxu0 %v725
    %v793 = vpop.f32.mrb[0].mxu0
    %v794 = vadd.f32 0.0, %v793
    %v795 = vpop.f32.mrb[0].mxu0
    %796 = vdwg.mxu0
    %v798 = vrot.slane %v794, 2
    %v800 = vadd.f32 %v114, %v798
    %v801 = vtanh.pop %v800
    %v803 = vrot.slane %v801, 6
    %v805 = vmul.f32 %v36, %v803
    %v806 = vadd.f32 %v805, %v37
    %v807 = vmul.f32 %v806, %v715
    %809 = vrot.lane.b32.xlu0 %v806, 64
    %v810 = vpop.permute.xlu0 %809
    %v812 = vmul.f32 %v806, %v810
    %814 = vrot.lane.b32.xlu0 %v812, 32
    %v815 = vpop.permute.xlu0 %814
    %v817 = vadd.f32 %v807, %v815
    %v818 = vtanh.pop %v817
    %820 = vrot.lane.b32.xlu0 %v818, 64
    %v821 = vpop.permute.xlu0 %820
    %v823 = vmul.f32 %v806, %v821
    %825 = vrot.lane.b32.xlu0 %v823, 32
    %v826 = vpop.permute.xlu0 %825
    %v827 = vsel %vm117, %v826, 0
    %829 = vmatprep.subr.mxu0 0.0
    %830 = vmatpush1.msra.mxu0 %v31
    %831 = vmatprep.subr.mxu0 0.0
    %832 = vmatpush1.msra.mxu0 %v32
    %833 = vmatprep.subr.mxu0 0.0
    %834 = vmatpush1.msra.mxu0 %v33
    %835 = vmatprep.subr.mxu0 0.0
    %836 = vmatpush1.msra.mxu0 %v34
    %837 = vmatprep.subr.mxu0 0.0
    %838 = vmatpush1.msra.mxu0 0.0
    %839 = vmatprep.subr.mxu0 0.0
    %840 = vmatpush1.msra.mxu0 0.0
    %841 = vmatprep.subr.mxu0 0.0
    %842 = vmatpush1.msra.mxu0 0.0
    %843 = vmatprep.subr.mxu0 0.0
    %844 = vmatpush1.msra.mxu0 0.0
    %845 = vmatprep.subr.mxu0 0.0
    %846 = vmatpush1.msra.mxu0 0.0
    %847 = vmatprep.subr.mxu0 0.0
    %848 = vmatpush1.msra.mxu0 0.0
    %849 = vmatprep.subr.mxu0 0.0
    %850 = vmatpush1.msra.mxu0 0.0
    %851 = vmatprep.subr.mxu0 0.0
    %852 = vmatpush1.msra.mxu0 0.0
    %853 = vmatprep.subr.mxu0 0.0
    %854 = vmatpush1.msra.mxu0 0.0
    %855 = vmatprep.subr.mxu0 0.0
    %856 = vmatpush1.msra.mxu0 0.0
    %857 = vmatprep.subr.mxu0 0.0
    %858 = vmatpush1.msra.mxu0 0.0
    %859 = vmatprep.subr.mxu0 0.0
    %860 = vmatpush1.msra.mxu0 0.0
    %861 = vmatprep.subr.mxu0 0.0
    %862 = vmatpush1.msra.mxu0 0.0
    %863 = vmatprep.subr.mxu0 0.0
    %864 = vmatpush1.msra.mxu0 0.0
    %865 = vmatprep.subr.mxu0 0.0
    %866 = vmatpush1.msra.mxu0 0.0
    %867 = vmatprep.subr.mxu0 0.0
    %868 = vmatpush1.msra.mxu0 0.0
    %869 = vmatprep.subr.mxu0 0.0
    %870 = vmatpush1.msra.mxu0 0.0
    %871 = vmatprep.subr.mxu0 0.0
    %872 = vmatpush1.msra.mxu0 0.0
    %873 = vmatprep.subr.mxu0 0.0
    %874 = vmatpush1.msra.mxu0 0.0
    %875 = vmatprep.subr.mxu0 0.0
    %876 = vmatpush1.msra.mxu0 0.0
    %877 = vmatprep.subr.mxu0 0.0
    %878 = vmatpush1.msra.mxu0 0.0
    %879 = vmatprep.subr.mxu0 0.0
    %880 = vmatpush1.msra.mxu0 0.0
    %881 = vmatprep.subr.mxu0 0.0
    %882 = vmatpush1.msra.mxu0 0.0
    %883 = vmatprep.subr.mxu0 0.0
    %884 = vmatpush1.msra.mxu0 0.0
    %885 = vmatprep.subr.mxu0 0.0
    %886 = vmatpush1.msra.mxu0 0.0
    %887 = vmatprep.subr.mxu0 0.0
    %888 = vmatpush1.msra.mxu0 0.0
    %889 = vmatprep.subr.mxu0 0.0
    %890 = vmatpush1.msra.mxu0 0.0
    %891 = vmatprep.subr.mxu0 0.0
    %892 = vmatpush1.msra.mxu0 0.0
    %893 = vmatprep.mubr.f32.mxu0 0.0
    %894 = vmatmul.mubr.f32.gmra.mrb[0].mxu0 %v827
    %v895 = vpop.f32.mrb[0].mxu0
    %v896 = vadd.f32 0.0, %v895
    %v897 = vpop.f32.mrb[0].mxu0
    %898 = vdwg.mxu0
    %v900 = vrot.slane %v896, 1
    %v902 = vadd.f32 %v114, %v900
    %v903 = vtanh.pop %v902
    %v905 = vrot.slane %v903, 7
    %v907 = vmul.f32 %v36, %v905
    %v908 = vadd.f32 %v907, %v37
    %v909 = vmul.f32 %v908, %v817
    %911 = vrot.lane.b32.xlu0 %v908, 64
    %v912 = vpop.permute.xlu0 %911
    %v914 = vmul.f32 %v908, %v912
    %916 = vrot.lane.b32.xlu0 %v914, 32
    %v917 = vpop.permute.xlu0 %916
    %v919 = vadd.f32 %v909, %v917
    %v920 = vtanh.pop %v919
    %922 = vrot.lane.b32.xlu0 %v920, 64
    %v923 = vpop.permute.xlu0 %922
    %v925 = vmul.f32 %v908, %v923
    %v926 = vrot.slane %v313, 7
    %v928 = vrot.slane %v415, 6
    %v930 = vrot.slane %v517, 5
    %v932 = vrot.slane %v619, 4
    %v934 = vrot.slane %v721, 3
    %v936 = vrot.slane %v823, 2
    %v939 = vrot.slane %v925, 1
    %vm941 = vcmask 1040384
    %v942 = vsel %vm941, %v211, %v926
    %vm943 = vcmask 1041408
    %v944 = vsel %vm943, %v942, %v928
    %vm945 = vcmask 1042432
    %v946 = vsel %vm945, %v944, %v930
    %vm947 = vcmask 1043456
    %v948 = vsel %vm947, %v946, %v932
    %vm949 = vcmask 1044480
    %v950 = vsel %vm949, %v948, %v934
    %vm951 = vcmask 1045504
    %v952 = vsel %vm951, %v950, %v936
    %vm953 = vcmask 1046528
    %v954 = vsel %vm953, %v952, %v939
    %v955 = vld [vmem:[%s2] sm:$0xff]
    %v956 = vld [vmem:[%s2 + $0x8] sm:$0xff]
    %v957 = vld [vmem:[%s2 + $0x10] sm:$0xff]
    %v958 = vld [vmem:[%s2 + $0x18] sm:$0xff]
    %v959 = vld [vmem:[%s2 + $0x20] sm:$0x1]
    %v960 = vlaneseq
    %v961 = vshrl.u32 %v960, 7
    %v962 = vsub.s32 0, %v961
    %v963 = vrot.slane %v959, %v962
    %965 = vrot.lane.b32.xlu0 %v954, 32
    %v966 = vpop.permute.xlu0 %965
    %v967 = vsel %vm117, %v966, 0
    %969 = vmatprep.subr.mxu0 0.0
    %970 = vmatpush1.msra.mxu0 %v955
    %971 = vmatprep.subr.mxu0 0.0
    %972 = vmatpush1.msra.mxu0 %v956
    %973 = vmatprep.subr.mxu0 0.0
    %974 = vmatpush1.msra.mxu0 %v957
    %975 = vmatprep.subr.mxu0 0.0
    %976 = vmatpush1.msra.mxu0 %v958
    %977 = vmatprep.subr.mxu0 0.0
    %978 = vmatpush1.msra.mxu0 0.0
    %979 = vmatprep.subr.mxu0 0.0
    %980 = vmatpush1.msra.mxu0 0.0
    %981 = vmatprep.subr.mxu0 0.0
    %982 = vmatpush1.msra.mxu0 0.0
    %983 = vmatprep.subr.mxu0 0.0
    %984 = vmatpush1.msra.mxu0 0.0
    %985 = vmatprep.subr.mxu0 0.0
    %986 = vmatpush1.msra.mxu0 0.0
    %987 = vmatprep.subr.mxu0 0.0
    %988 = vmatpush1.msra.mxu0 0.0
    %989 = vmatprep.subr.mxu0 0.0
    %990 = vmatpush1.msra.mxu0 0.0
    %991 = vmatprep.subr.mxu0 0.0
    %992 = vmatpush1.msra.mxu0 0.0
    %993 = vmatprep.subr.mxu0 0.0
    %994 = vmatpush1.msra.mxu0 0.0
    %995 = vmatprep.subr.mxu0 0.0
    %996 = vmatpush1.msra.mxu0 0.0
    %997 = vmatprep.subr.mxu0 0.0
    %998 = vmatpush1.msra.mxu0 0.0
    %999 = vmatprep.subr.mxu0 0.0
    %1000 = vmatpush1.msra.mxu0 0.0
    %1001 = vmatprep.subr.mxu0 0.0
    %1002 = vmatpush1.msra.mxu0 0.0
    %1003 = vmatprep.subr.mxu0 0.0
    %1004 = vmatpush1.msra.mxu0 0.0
    %1005 = vmatprep.subr.mxu0 0.0
    %1006 = vmatpush1.msra.mxu0 0.0
    %1007 = vmatprep.subr.mxu0 0.0
    %1008 = vmatpush1.msra.mxu0 0.0
    %1009 = vmatprep.subr.mxu0 0.0
    %1010 = vmatpush1.msra.mxu0 0.0
    %1011 = vmatprep.subr.mxu0 0.0
    %1012 = vmatpush1.msra.mxu0 0.0
    %1013 = vmatprep.subr.mxu0 0.0
    %1014 = vmatpush1.msra.mxu0 0.0
    %1015 = vmatprep.subr.mxu0 0.0
    %1016 = vmatpush1.msra.mxu0 0.0
    %1017 = vmatprep.subr.mxu0 0.0
    %1018 = vmatpush1.msra.mxu0 0.0
    %1019 = vmatprep.subr.mxu0 0.0
    %1020 = vmatpush1.msra.mxu0 0.0
    %1021 = vmatprep.subr.mxu0 0.0
    %1022 = vmatpush1.msra.mxu0 0.0
    %1023 = vmatprep.subr.mxu0 0.0
    %1024 = vmatpush1.msra.mxu0 0.0
    %1025 = vmatprep.subr.mxu0 0.0
    %1026 = vmatpush1.msra.mxu0 0.0
    %1027 = vmatprep.subr.mxu0 0.0
    %1028 = vmatpush1.msra.mxu0 0.0
    %1029 = vmatprep.subr.mxu0 0.0
    %1030 = vmatpush1.msra.mxu0 0.0
    %1031 = vmatprep.subr.mxu0 0.0
    %1032 = vmatpush1.msra.mxu0 0.0
    %1033 = vmatprep.mubr.f32.mxu0 0.0
    %1034 = vmatmul.mubr.f32.gmra.mrb[0].mxu0 %v967
    %v1035 = vpop.f32.mrb[0].mxu0
    %v1036 = vadd.f32 %v963, %v1035
    %v1037 = vpop.f32.mrb[0].mxu0
    %1038 = vdwg.mxu0
    %vm1039 = vcmask 64512
    %v1040 = vsel %vm1039, %v1036, -inf
    %1041 = vmax.xlane.f32.xlu0 %v1040
    %v1042 = vpop.xlane.xlu0 %1041
    %v1043 = vsub.f32 %v1036, %v1042
    %v1044 = vmul.f32 %v1043, 1.442695
    %v1045 = vpow.pop %v1044
    %v1046 = vsel %vm1039, %v1045, 0.0
    %1047 = vadd.xlane.f32.xlu0 %v1046
    %v1048 = vpop.xlane.xlu0 %1047
    %v1049 = vlog2.pop %v1048
    %v1050 = vmul.f32 %v1049, 0.6931472
    %v1051 = vadd.f32 %v1050, %v1042
    %v1052 = vsub.f32 %v1036, %v1051
    %1053 = vst.msk [vmem:[#allocation5] sm:$0xff] %vm1039, %v1052
    // Predicated region
    $region18: #{tpu_custom_call.1} parent=1 // pred_check
      _
    $region19: #{tpu_custom_call.1} parent=1 // pred_check_branch
      %1055 = sbr.rel (0) target = $region21
    $region20: #{tpu_custom_call.1} parent=1 // pred_region
      %s1057 = ssub.s32 128, 128
      %1058 = vsyncadd [#allocation4], %s1057
      %s1060 = sshll.u32 [#allocation5], 4
      %s1061 = int_to_ptr.vmem [resolvable:$true] %s1060
      %1063 = dma.vmem_to_hbm [thread:$0]  %s1061, 128, %s3, [#allocation4]
    $region21: #{tpu_custom_call.1} parent=1 // pred_fallthru
      _
    // Predicated region
    $region22: #{tpu_custom_call.1} parent=1 // pred_check
      _
    $region23: #{tpu_custom_call.1} parent=1 // pred_check_branch
      %1065 = sbr.rel (0) target = $region25
    $region24: #{tpu_custom_call.1} parent=1 // pred_region
      %1066 = dma.done [#allocation4], 128
    $region25: #{tpu_custom_call.1} parent=1 // pred_fallthru
      _
    %1067 = vsyncpa [#allocation3], 1
    %1068 = vsyncpa [#allocation4], 1

</llo_original>
